<compile_context>
chip_gen: v5e
topology: v5e:2x2
jax: 0.10.0
libtpu: 0.0.40
codegen_flags: <defaults>
</compile_context>

<pallas_src>
import jax
import jax.numpy as jnp
from jax.experimental import pallas as pl
from jax.experimental.pallas import tpu as pltpu


def _round_up(a, b):
    return ((a + b - 1) // b) * b


def _tc_per_chip():
    """TensorCores visible to one kernel instance: 2 on v7x-class, else 1."""
    try:
        kind = jax.devices()[0].device_kind.lower()
    except Exception:
        return 1
    return 2 if ("v7" in kind or "7x" in kind) else 1


# ----------------------------------------------------------------------------
# Kernel 1: BatchNorm1d batch statistics (sum / sum-of-squares) over all rows.
# Row-tiled grid; (1, D) outputs stay resident in VMEM across the "arbitrary"
# reduction axis.  Zero-padded rows contribute nothing; the wrapper divides by
# the real element count, so padding does not change the statistics.
# ----------------------------------------------------------------------------
def bn_stats_kernel(x_ref, sum_ref, sumsq_ref):
    @pl.when(pl.program_id(0) == 0)
    def _():
        sum_ref[...] = jnp.zeros_like(sum_ref)
        sumsq_ref[...] = jnp.zeros_like(sumsq_ref)

    x = x_ref[...].astype(jnp.float32)                        # (tm, D)
    sum_ref[...] += jnp.sum(x, axis=0, keepdims=True)         # (1, D)
    sumsq_ref[...] += jnp.sum(x * x, axis=0, keepdims=True)   # (1, D)


# ----------------------------------------------------------------------------
# Kernel 2: fused (BatchNorm-folded) input projection + LSTM recurrence.
# Grid = (batch_shards ["parallel"], time_blocks ["arbitrary"]).
# Per grid step: one (TB*NBT, D)x(D, 4H) MXU push for the whole time block,
# then TB recurrence steps (one small MXU push each); h/c carried in VMEM
# scratch across time blocks.  PyTorch gate order [i, f, g, o]; bias=False.
# ----------------------------------------------------------------------------
def lstm_fused_kernel(x_ref, bias_ref, wih_s_ref, whh_c_ref, out_ref,
                      h_sc, c_sc, xp_sc):
    TB, NBT, D = x_ref.shape
    H = h_sc.shape[-1]
    H4 = 4 * H
    cdt = wih_s_ref.dtype        # MXU operand dtype (bf16 or f32)

    @pl.when(pl.program_id(1) == 0)  # first time block of this batch shard
    def _():
        h_sc[...] = jnp.zeros_like(h_sc)
        c_sc[...] = jnp.zeros_like(c_sc)

    # Input projection with the BN affine folded into the weights:
    #   xp = x @ (diag(scale) @ W_ih^T) + (shift @ W_ih^T)
    x_blk = x_ref[...].reshape(TB * NBT, D).astype(cdt)
    xp = jnp.dot(x_blk, wih_s_ref[...],
                 preferred_element_type=jnp.float32)          # (TB*NBT, 4H)
    xp = xp + bias_ref[...]                                   # + (1, 4H)
    xp_sc[...] = xp.reshape(TB, NBT, H4)

    whh_c = whh_c_ref[...]                                    # (H, 4H)

    # One tanh pass over the full (NBT, 4H) vreg; sigmoid gates recovered via
    # sigmoid(x) = 0.5*(1 + tanh(x/2)).  Mask / pre-scale hoisted out of loop.
    lane = jax.lax.broadcasted_iota(jnp.int32, (NBT, H4), 1)
    is_g = jnp.logical_and(lane >= 2 * H, lane < 3 * H)
    pre_scale = jnp.where(is_g, jnp.float32(1.0), jnp.float32(0.5))

    def step(tt, carry):
        h, c = carry
        gates = xp_sc[tt] + jnp.dot(h.astype(cdt), whh_c,
                                    preferred_element_type=jnp.float32)
        th = jnp.tanh(pre_scale * gates)
        act = jnp.where(is_g, th, 0.5 * th + 0.5)
        i_g = act[:, 0 * H:1 * H]
        f_g = act[:, 1 * H:2 * H]
        g_g = act[:, 2 * H:3 * H]
        o_g = act[:, 3 * H:4 * H]
        c_new = f_g * c + i_g * g_g
        h_new = o_g * jnp.tanh(c_new)
        out_ref[tt] = h_new.astype(out_ref.dtype)
        return h_new, c_new

    h_fin, c_fin = jax.lax.fori_loop(0, TB, step, (h_sc[...], c_sc[...]),
                                     unroll=min(TB, 8))
    h_sc[...] = h_fin
    c_sc[...] = c_fin


# ----------------------------------------------------------------------------
# Wrapper
# ----------------------------------------------------------------------------
def batch_rnn_forward(x, gamma, beta, w_ih, w_hh, *, time_block=32,
                      compute_dtype=jnp.bfloat16, eps=1e-5):
    """x: (T, N, D); gamma/beta: (D,); w_ih: (4H, D); w_hh: (4H, H)."""
    T, N, D = x.shape
    H4 = w_ih.shape[0]
    H = H4 // 4

    # ---------------- tiling decisions ----------------
    TB = max(1, min(time_block, T))
    T_pad = _round_up(T, TB)

    # Batch shards: one per TensorCore (v5e/v6e: 1, v7x: 2), only if N > 8.
    NB = _tc_per_chip() if N > 8 else 1
    NBT = _round_up(pl.cdiv(N, NB), 8)
    N_pad = NB * NBT

    # Single padded copy of x, shared by both kernels (input dtype preserved;
    # kernels cast internally).
    x_pad = x
    if (T_pad, N_pad) != (T, N):
        x_pad = jnp.pad(x, ((0, T_pad - T), (0, N_pad - N), (0, 0)))

    # ---------------- Stage A: BN batch statistics (Pallas, tiled) ---------
    R = T * N                    # real element count (padding rows are zeros)
    Rp = T_pad * N_pad
    nt = T_pad // TB
    # Stats tile = k whole (TB, N_pad) time-blocks, capped near 1024 rows.
    k = 1
    for cand in range(1, nt + 1):
        if nt % cand == 0 and cand * TB * N_pad <= 1024:
            k = cand
    tm = k * TB * N_pad

    s, ss = pl.pallas_call(
        bn_stats_kernel,
        out_shape=(jax.ShapeDtypeStruct((1, D), jnp.float32),
                   jax.ShapeDtypeStruct((1, D), jnp.float32)),
        grid=(Rp // tm,),
        in_specs=[pl.BlockSpec((tm, D), lambda i: (i, 0))],
        out_specs=(pl.BlockSpec((1, D), lambda i: (0, 0)),
                   pl.BlockSpec((1, D), lambda i: (0, 0))),
        compiler_params=pltpu.CompilerParams(
            dimension_semantics=("arbitrary",)),
    )(x_pad.reshape(Rp, D))

    count = jnp.float32(R)
    mean = s / count
    var = jnp.maximum(ss / count - mean * mean, 0.0)      # biased (train) var
    scale = gamma.reshape(1, D).astype(jnp.float32) * jax.lax.rsqrt(var + eps)
    shift = beta.reshape(1, D).astype(jnp.float32) - mean * scale

    # Fold the BN affine into the input projection.
    wih_t = w_ih.T.astype(jnp.float32)                     # (D, 4H)
    whh_t = w_hh.T.astype(jnp.float32)                     # (H, 4H)
    wih_s = (scale.reshape(D, 1) * wih_t).astype(compute_dtype)
    whh_c = whh_t.astype(compute_dtype)
    bias = jnp.dot(shift, wih_t)                           # (1, 4H), f32

    # ---------------- Stage B: fused projection + LSTM recurrence ----------
    out = pl.pallas_call(
        lstm_fused_kernel,
        out_shape=jax.ShapeDtypeStruct((T_pad, N_pad, H), jnp.float32),
        grid_spec=pltpu.PrefetchScalarGridSpec(
            num_scalar_prefetch=0,
            grid=(NB, T_pad // TB),
            in_specs=[
                pl.BlockSpec((TB, NBT, D), lambda b, t: (t, b, 0)),
                pl.BlockSpec((1, H4), lambda b, t: (0, 0)),
                pl.BlockSpec((D, H4), lambda b, t: (0, 0)),
                pl.BlockSpec((H, H4), lambda b, t: (0, 0)),
            ],
            out_specs=pl.BlockSpec((TB, NBT, H), lambda b, t: (t, b, 0)),
            scratch_shapes=[
                pltpu.VMEM((NBT, H), jnp.float32),        # h carry
                pltpu.VMEM((NBT, H), jnp.float32),        # c carry
                pltpu.VMEM((TB, NBT, H4), jnp.float32),   # projected gates
            ],
        ),
        compiler_params=pltpu.CompilerParams(
            dimension_semantics=("parallel", "arbitrary")),
    )(x_pad, bias, wih_s, whh_c)

    return out[:T, :N, :]  # (T, N, H) — bidirectional=False, no direction sum


# ----------------------------------------------------------------------------
# Pure-JAX reference (same semantics as the PyTorch forward, full f32).
# ----------------------------------------------------------------------------
def ref_forward(x, gamma, beta, w_ih, w_hh):
    T, N, D = x.shape
    H = w_hh.shape[1]
    x2 = x.reshape(T * N, D)
    mean = x2.mean(axis=0)
    var = ((x2 - mean) ** 2).mean(axis=0)
    xn = (x2 - mean) / jnp.sqrt(var + 1e-5) * gamma + beta
    xp = (xn @ w_ih.T).reshape(T, N, 4 * H)

    def step(carry, xt):
        h, c = carry
        gates = xt + h @ w_hh.T
        i = jax.nn.sigmoid(gates[:, 0 * H:1 * H])
        f = jax.nn.sigmoid(gates[:, 1 * H:2 * H])
        g = jnp.tanh(gates[:, 2 * H:3 * H])
        o = jax.nn.sigmoid(gates[:, 3 * H:4 * H])
        c = f * c + i * g
        h = o * jnp.tanh(c)
        return (h, c), h

    init = (jnp.zeros((N, H), jnp.float32), jnp.zeros((N, H), jnp.float32))
    _, hs = jax.lax.scan(step, init, xp)
    return hs


if __name__ == "__main__":
    key = jax.random.PRNGKey(0)
    kx, kg, kb, kih, khh, kx2 = jax.random.split(key, 6)

    input_size, hidden_size = 16, 32     # 4H = 128 -> lane-aligned gate block

    gamma = 1.0 + 0.1 * jax.random.normal(kg, (input_size,), dtype=jnp.float32)
    beta = 0.1 * jax.random.normal(kb, (input_size,), dtype=jnp.float32)
    bound = 1.0 / jnp.sqrt(jnp.float32(hidden_size))
    w_ih = jax.random.uniform(kih, (4 * hidden_size, input_size),
                              minval=-bound, maxval=bound, dtype=jnp.float32)
    w_hh = jax.random.uniform(khh, (4 * hidden_size, hidden_size),
                              minval=-bound, maxval=bound, dtype=jnp.float32)

    # --- Test 1: small shapes, strict f32 compute path vs. reference -------
    T, N = 8, 2
    x = jax.random.normal(kx, (T, N, input_size), dtype=jnp.float32)
    out = jax.block_until_ready(
        batch_rnn_forward(x, gamma, beta, w_ih, w_hh,
                          compute_dtype=jnp.float32))
    ref = jax.block_until_ready(ref_forward(x, gamma, beta, w_ih, w_hh))
    assert out.shape == (T, N, hidden_size)
    assert jnp.allclose(out, ref, atol=1e-3, rtol=1e-3), "f32 mismatch vs ref"

    # --- Test 2: longer sequence, default bf16 MXU path, padded T/N,
    #             larger time block + partial-unroll recurrence -------------
    T2, N2 = 40, 10
    x2 = jax.random.normal(kx2, (T2, N2, input_size), dtype=jnp.float32)
    out2 = jax.block_until_ready(
        batch_rnn_forward(x2, gamma, beta, w_ih, w_hh, time_block=16))
    ref2 = jax.block_until_ready(ref_forward(x2, gamma, beta, w_ih, w_hh))
    assert out2.shape == (T2, N2, hidden_size)
    assert jnp.allclose(out2, ref2, atol=3e-2, rtol=3e-2), "bf16 mismatch vs ref"

    print("KERNEL_OK")
</pallas_src>

<mosaic_0001>
module attributes {stable_mosaic.version = 11 : i64} {
  func.func @bn_stats_kernel(%arg0: i32, %arg1: memref<64x16xf32, #tpu.memory_space<vmem>>, %arg2: memref<1x16xf32, #tpu.memory_space<vmem>>, %arg3: memref<1x16xf32, #tpu.memory_space<vmem>>) attributes {dimension_semantics = [#tpu.dimension_semantics<arbitrary>], iteration_bounds = array<i64: 1>, scalar_prefetch = 0 : i64, scratch_operands = 0 : i64, tpu.core_type = #tpu.core_type<tc>, window_params = [{transform_indices = @transform_0, window_bounds = array<i64: 64, 16>}, {pipeline_mode = #tpu.pipeline_mode<synchronous>, transform_indices = @transform_1, window_bounds = array<i64: 1, 16>}, {pipeline_mode = #tpu.pipeline_mode<synchronous>, transform_indices = @transform_2, window_bounds = array<i64: 1, 16>}]} {
    %c0_i32 = arith.constant 0 : i32
    %0 = arith.cmpi eq, %arg0, %c0_i32 : i32
    %1 = arith.extui %0 : i1 to i32
    %c0_i32_0 = arith.constant 0 : i32
    %2 = arith.cmpi ne, %1, %c0_i32_0 : i32
    scf.if %2 {
      %cst_11 = arith.constant 0.000000e+00 : f32
      %15 = vector.broadcast %cst_11 : f32 to vector<1x16xf32>
      %c0_12 = arith.constant 0 : index
      %c0_13 = arith.constant 0 : index
      %16 = vector.load %arg2[%c0_12, %c0_13] : memref<1x16xf32, #tpu.memory_space<vmem>>, vector<1x16xf32>
      tpu.vector_store %arg2[%c0_12, %c0_13], %15 {strides = array<i32>} : memref<1x16xf32, #tpu.memory_space<vmem>>, vector<1x16xf32>,
      %cst_14 = arith.constant 0.000000e+00 : f32
      %17 = vector.broadcast %cst_14 : f32 to vector<1x16xf32>
      %c0_15 = arith.constant 0 : index
      %c0_16 = arith.constant 0 : index
      %18 = vector.load %arg3[%c0_15, %c0_16] : memref<1x16xf32, #tpu.memory_space<vmem>>, vector<1x16xf32>
      tpu.vector_store %arg3[%c0_15, %c0_16], %17 {strides = array<i32>} : memref<1x16xf32, #tpu.memory_space<vmem>>, vector<1x16xf32>,
    } else {
    }
    %c0 = arith.constant 0 : index
    %c0_1 = arith.constant 0 : index
    %3 = vector.load %arg1[%c0, %c0_1] : memref<64x16xf32, #tpu.memory_space<vmem>>, vector<64x16xf32>
    %c0_2 = arith.constant 0 : index
    %c0_3 = arith.constant 0 : index
    %4 = vector.load %arg2[%c0_2, %c0_3] : memref<1x16xf32, #tpu.memory_space<vmem>>, vector<1x16xf32>
    %cst = arith.constant dense<0.000000e+00> : vector<16xf32>
    %5 = vector.multi_reduction <add>, %3, %cst [0] : vector<64x16xf32> to vector<16xf32>
    %6 = vector.shape_cast %5 : vector<16xf32> to vector<1x16xf32>
    %7 = arith.addf %4, %6 : vector<1x16xf32>
    %c0_4 = arith.constant 0 : index
    %c0_5 = arith.constant 0 : index
    %8 = vector.load %arg2[%c0_4, %c0_5] : memref<1x16xf32, #tpu.memory_space<vmem>>, vector<1x16xf32>
    tpu.vector_store %arg2[%c0_4, %c0_5], %7 {strides = array<i32>} : memref<1x16xf32, #tpu.memory_space<vmem>>, vector<1x16xf32>,
    %c0_6 = arith.constant 0 : index
    %c0_7 = arith.constant 0 : index
    %9 = vector.load %arg3[%c0_6, %c0_7] : memref<1x16xf32, #tpu.memory_space<vmem>>, vector<1x16xf32>
    %10 = arith.mulf %3, %3 : vector<64x16xf32>
    %cst_8 = arith.constant dense<0.000000e+00> : vector<16xf32>
    %11 = vector.multi_reduction <add>, %10, %cst_8 [0] : vector<64x16xf32> to vector<16xf32>
    %12 = vector.shape_cast %11 : vector<16xf32> to vector<1x16xf32>
    %13 = arith.addf %9, %12 : vector<1x16xf32>
    %c0_9 = arith.constant 0 : index
    %c0_10 = arith.constant 0 : index
    %14 = vector.load %arg3[%c0_9, %c0_10] : memref<1x16xf32, #tpu.memory_space<vmem>>, vector<1x16xf32>
    tpu.vector_store %arg3[%c0_9, %c0_10], %13 {strides = array<i32>} : memref<1x16xf32, #tpu.memory_space<vmem>>, vector<1x16xf32>,
    return
  }
  func.func @transform_0(%arg0: i32) -> (i32, i32) {
    %c0_i32 = arith.constant 0 : i32
    %c0_i32_0 = arith.constant 0 : i32
    return %arg0, %c0_i32 : i32, i32
  }
  func.func @transform_1(%arg0: i32) -> (i32, i32) {
    %c0_i32 = arith.constant 0 : i32
    %c0_i32_0 = arith.constant 0 : i32
    %c0_i32_1 = arith.constant 0 : i32
    return %c0_i32, %c0_i32_0 : i32, i32
  }
  func.func @transform_2(%arg0: i32) -> (i32, i32) {
    %c0_i32 = arith.constant 0 : i32
    %c0_i32_0 = arith.constant 0 : i32
    %c0_i32_1 = arith.constant 0 : i32
    return %c0_i32, %c0_i32_0 : i32, i32
  }
}

</mosaic_0001>

<llo_original>
// kernel: tpu_custom_call.1
$region0: #{tpu_custom_call.1}
  #allocation0 [shape = 'u32[]', space=smem, size = 0x4, offset = 0x4, fixed_abs, tag = 'smem constant byte address 0x4 - core index']
  #allocation1 [shape = 'u32[72,128]{1,0:T(1,128)}', space=vmem, size = 0x9000, scoped, tag = 'internal scratch']
  %s0 = inlined_call_operand.vmem [shape: f32[64,16], index: 0, kind: input, shape index: {}]
  %s1 = inlined_call_operand.hbm [shape: f32[1,16], index: 1, kind: output, shape index: {0}]
  %s2 = inlined_call_operand.hbm [shape: f32[1,16], index: 2, kind: output, shape index: {1}]
  %3 = xla_tuple %s1, %s2
  %s4 = sld [smem:[#allocation0]]
  $region26: #{tpu_custom_call.1} parent=0
    _
  %s6 = ssub.s32 1, %s4
  %s7 = scalar_select 0, %s6, %s4
  $region1: #{tpu_custom_call.1} parent=0
    #allocation2 [shape = 'u8[512]{0}', space=vmem, size = 0x400, scoped, tag = 'output window, operand 0, single buffered']
    #allocation3 [shape = 's32[1]{0}', space=sflag, size = 0x4, scoped, tag = 'scoped memory for tpu_custom_call.1']
    #allocation4 [shape = 'u8[512]{0}', space=vmem, size = 0x400, scoped, tag = 'output window, operand 1, single buffered']
    #allocation5 [shape = 's32[1]{0}', space=sflag, size = 0x4, scoped, tag = 'scoped memory for tpu_custom_call.1']
    %8 = vsyncpa [#allocation3], 0
    %9 = vsyncpa [#allocation5], 0
    // Predicated region
    $region2: #{tpu_custom_call.1} parent=1 // pred_check
      _
    $region3: #{tpu_custom_call.1} parent=1 // pred_check_branch
      %11 = sbr.rel (0) target = $region5
    $region4: #{tpu_custom_call.1} parent=1 // pred_region
      _
    $region5: #{tpu_custom_call.1} parent=1 // pred_fallthru
      _
    %p12 = scmp.eq.s32.totalorder 0, 0
    // Predicated region
    $region6: #{tpu_custom_call.1} parent=1 // pred_check
      %p13 = pneg %p12
    $region7: #{tpu_custom_call.1} parent=1 // pred_check_branch
      %15 = sbr.rel (%p13) target = $region9
    $region8: #{tpu_custom_call.1} parent=1 // pred_region
      %vm16 = vcmask 122880
      %17 = vst.msk [vmem:[#allocation2] sm:$0x1] %vm16, 0.0
      %18 = vst.msk [vmem:[#allocation4] sm:$0x1] %vm16, 0.0
    $region9: #{tpu_custom_call.1} parent=1 // pred_fallthru
      _
    %v19 = vld [vmem:[%s0] sm:$0xff]
    %v20 = vld [vmem:[%s0 + $0x8] sm:$0xff]
    %v21 = vld [vmem:[%s0 + $0x10] sm:$0xff]
    %v22 = vld [vmem:[%s0 + $0x18] sm:$0xff]
    %v23 = vld [vmem:[%s0 + $0x20] sm:$0xff]
    %v24 = vld [vmem:[%s0 + $0x28] sm:$0xff]
    %v25 = vld [vmem:[%s0 + $0x30] sm:$0xff]
    %v26 = vld [vmem:[%s0 + $0x38] sm:$0xff]
    %v27 = vld [vmem:[#allocation2] sm:$0x1]
    %vm28 = vcmask 130048
    %v29 = vsel %vm28, %v19, 0.0
    %v30 = vsel %vm28, %v20, 0.0
    %v31 = vadd.f32 %v29, %v30
    %v32 = vsel %vm28, %v21, 0.0
    %v33 = vadd.f32 %v31, %v32
    %v34 = vsel %vm28, %v22, 0.0
    %v35 = vadd.f32 %v33, %v34
    %v36 = vsel %vm28, %v23, 0.0
    %v37 = vadd.f32 %v35, %v36
    %v38 = vsel %vm28, %v24, 0.0
    %v39 = vadd.f32 %v37, %v38
    %v40 = vsel %vm28, %v25, 0.0
    %v41 = vadd.f32 %v39, %v40
    %v42 = vsel %vm28, %v26, 0.0
    %v43 = vadd.f32 %v41, %v42
    %v44 = vrot.slane %v43, 4
    %v45 = vadd.f32 %v43, %v44
    %v46 = vrot.slane %v45, 2
    %v47 = vadd.f32 %v45, %v46
    %v48 = vrot.slane %v47, 1
    %v49 = vadd.f32 %v47, %v48
    %v50 = vadd.f32 %v27, %v49
    %vm51 = vcmask 122880
    %52 = vst.msk [vmem:[#allocation2] sm:$0x1] %vm51, %v50
    %v53 = vld [vmem:[#allocation4] sm:$0x1]
    %v54 = vmul.f32 %v19, %v19
    %v55 = vmul.f32 %v20, %v20
    %v56 = vmul.f32 %v21, %v21
    %v57 = vmul.f32 %v22, %v22
    %v58 = vmul.f32 %v23, %v23
    %v59 = vmul.f32 %v24, %v24
    %v60 = vmul.f32 %v25, %v25
    %v61 = vmul.f32 %v26, %v26
    %v62 = vsel %vm28, %v54, 0.0
    %v63 = vsel %vm28, %v55, 0.0
    %v64 = vadd.f32 %v62, %v63
    %v65 = vsel %vm28, %v56, 0.0
    %v66 = vadd.f32 %v64, %v65
    %v67 = vsel %vm28, %v57, 0.0
    %v68 = vadd.f32 %v66, %v67
    %v69 = vsel %vm28, %v58, 0.0
    %v70 = vadd.f32 %v68, %v69
    %v71 = vsel %vm28, %v59, 0.0
    %v72 = vadd.f32 %v70, %v71
    %v73 = vsel %vm28, %v60, 0.0
    %v74 = vadd.f32 %v72, %v73
    %v75 = vsel %vm28, %v61, 0.0
    %v76 = vadd.f32 %v74, %v75
    %v77 = vrot.slane %v76, 4
    %v78 = vadd.f32 %v76, %v77
    %v79 = vrot.slane %v78, 2
    %v80 = vadd.f32 %v78, %v79
    %v81 = vrot.slane %v80, 1
    %v82 = vadd.f32 %v80, %v81
    %v83 = vadd.f32 %v53, %v82
    %84 = vst.msk [vmem:[#allocation4] sm:$0x1] %vm51, %v83
    // Predicated region
    $region10: #{tpu_custom_call.1} parent=1 // pred_check
      _
    $region11: #{tpu_custom_call.1} parent=1 // pred_check_branch
      %86 = sbr.rel (0) target = $region13
    $region12: #{tpu_custom_call.1} parent=1 // pred_region
      %88 = vsyncadd [#allocation3], 0
      %s90 = sshll.u32 [#allocation2], 4
      %s91 = int_to_ptr.vmem [resolvable:$true] %s90
      %s92 = sshll.u32 %s1, 4
      %s93 = int_to_ptr.hbm [resolvable:$true] %s92
      %95 = dma.vmem_to_hbm [thread:$0]  %s91, 16, %s93, [#allocation3]
    $region13: #{tpu_custom_call.1} parent=1 // pred_fallthru
      _
    // Predicated region
    $region14: #{tpu_custom_call.1} parent=1 // pred_check
      _
    $region15: #{tpu_custom_call.1} parent=1 // pred_check_branch
      %97 = sbr.rel (0) target = $region17
    $region16: #{tpu_custom_call.1} parent=1 // pred_region
      %99 = vsyncadd [#allocation5], 0
      %s101 = sshll.u32 [#allocation4], 4
      %s102 = int_to_ptr.vmem [resolvable:$true] %s101
      %s103 = sshll.u32 %s2, 4
      %s104 = int_to_ptr.hbm [resolvable:$true] %s103
      %106 = dma.vmem_to_hbm [thread:$0]  %s102, 16, %s104, [#allocation5]
    $region17: #{tpu_custom_call.1} parent=1 // pred_fallthru
      _
    // Predicated region
    $region18: #{tpu_custom_call.1} parent=1 // pred_check
      _
    $region19: #{tpu_custom_call.1} parent=1 // pred_check_branch
      %108 = sbr.rel (0) target = $region21
    $region20: #{tpu_custom_call.1} parent=1 // pred_region
      %110 = dma.done [#allocation3], 16
    $region21: #{tpu_custom_call.1} parent=1 // pred_fallthru
      _
    // Predicated region
    $region22: #{tpu_custom_call.1} parent=1 // pred_check
      _
    $region23: #{tpu_custom_call.1} parent=1 // pred_check_branch
      %112 = sbr.rel (0) target = $region25
    $region24: #{tpu_custom_call.1} parent=1 // pred_region
      %114 = dma.done [#allocation5], 16
    $region25: #{tpu_custom_call.1} parent=1 // pred_fallthru
      _
    %115 = vsyncpa [#allocation3], 1
    %116 = vsyncpa [#allocation5], 1

</llo_original>
